<compile_context>
chip_gen: v7x
topology: tpu7x:2x2x1
jax: 0.10.0
libtpu: 0.0.40
codegen_flags: <defaults>
</compile_context>

<pallas_src>
import numpy as np
import jax
import jax.numpy as jnp
from jax.experimental import pallas as pl
from jax.experimental.pallas import tpu as pltpu


def _round_up(x: int, m: int) -> int:
    return ((x + m - 1) // m) * m


def _fourier_basis(harmonics: int, size: int) -> np.ndarray:
    """Matches torch.linspace(0, 2*pi, steps=size) + stacked sin/cos rows."""
    t = np.linspace(0.0, 2.0 * np.pi, num=size, dtype=np.float64)
    rows = []
    for i in range(1, harmonics + 1):
        rows.append(np.sin(i * t))
        rows.append(np.cos(i * t))
    return np.stack(rows, axis=0).astype(np.float32)  # (2H, size)


def _seasonality_kernel(theta_ref, w_ref, out_ref):
    # One MXU pass per batch tile: (TM, 4H) @ (4H, Tpad) -> (TM, Tpad).
    out_ref[...] = jnp.dot(theta_ref[...], w_ref[...],
                           preferred_element_type=jnp.float32)


class SeasonalityBasisPallas:
    def __init__(self, harmonics: int, backcast_size: int, forecast_size: int):
        self.harmonics = harmonics
        self.backcast_size = backcast_size
        self.forecast_size = forecast_size

        back = _fourier_basis(harmonics, backcast_size)   # (2H, Tb)
        fore = _fourier_basis(harmonics, forecast_size)   # (2H, Tf)

        # Keep plain (unfused) bases around for reference checks.
        self.backcast_basis = jnp.asarray(back)
        self.forecast_basis = jnp.asarray(fore)

        H2 = 2 * harmonics
        self.P = 4 * harmonics                              # theta feature dim
        Tb, Tf = backcast_size, forecast_size
        self.Tpad = _round_up(Tb + Tf, 128)                 # lane-dense output

        # Block-diagonal fused basis, zero-padded to a lane-dense width.
        W = np.zeros((self.P, self.Tpad), dtype=np.float32)
        W[H2:2 * H2, 0:Tb] = back                           # backcast from theta[:, 2H:]
        W[0:H2, Tb:Tb + Tf] = fore                          # forecast from theta[:, :2H]
        self.W = jnp.asarray(W)

    def __call__(self, theta: jnp.ndarray):
        theta = theta.astype(jnp.float32)
        B = theta.shape[0]

        # Batch tiling: TM rows per grid step (multiple of 8), bases resident.
        B8 = _round_up(B, 8)
        TM = min(512, B8)
        B_pad = _round_up(B8, TM)
        if B_pad != B:
            theta = jnp.pad(theta, ((0, B_pad - B), (0, 0)))

        grid = (B_pad // TM,)

        out = pl.pallas_call(
            _seasonality_kernel,
            out_shape=jax.ShapeDtypeStruct((B_pad, self.Tpad), jnp.float32),
            grid=grid,
            in_specs=[
                pl.BlockSpec((TM, self.P), lambda i: (i, 0)),          # theta tile
                pl.BlockSpec((self.P, self.Tpad), lambda i: (0, 0)),   # fused basis (resident)
            ],
            out_specs=pl.BlockSpec((TM, self.Tpad), lambda i: (i, 0)),
            compiler_params=pltpu.CompilerParams(
                dimension_semantics=("parallel",)),
        )(theta, self.W)

        out = out[:B]
        backcast = out[:, :self.backcast_size]
        forecast = out[:, self.backcast_size:self.backcast_size + self.forecast_size]
        return backcast, forecast


if __name__ == "__main__":
    harmonics = 4
    backcast_size = 16
    forecast_size = 8
    batch = 8

    module = SeasonalityBasisPallas(harmonics, backcast_size, forecast_size)

    key = jax.random.PRNGKey(0)
    theta = jax.random.normal(key, (batch, 4 * harmonics), dtype=jnp.float32)

    backcast, forecast = module(theta)
    jax.block_until_ready((backcast, forecast))

    # Reference (same math as torch.einsum('bp,pt->bt')).
    cut = 2 * harmonics
    back_ref = theta[:, cut:] @ module.backcast_basis
    fore_ref = theta[:, :cut] @ module.forecast_basis
    np.testing.assert_allclose(np.asarray(backcast), np.asarray(back_ref),
                               rtol=1e-5, atol=1e-5)
    np.testing.assert_allclose(np.asarray(forecast), np.asarray(fore_ref),
                               rtol=1e-5, atol=1e-5)

    assert backcast.shape == (batch, backcast_size)
    assert forecast.shape == (batch, forecast_size)
    print("KERNEL_OK")
</pallas_src>

<mosaic_0001>
module attributes {stable_mosaic.version = 11 : i64} {
  func.func @_seasonality_kernel(%arg0: i32, %arg1: memref<8x16xf32, #tpu.memory_space<vmem>>, %arg2: memref<16x128xf32, #tpu.memory_space<vmem>>, %arg3: memref<8x128xf32, #tpu.memory_space<vmem>>) attributes {dimension_semantics = [#tpu.dimension_semantics<parallel>], iteration_bounds = array<i64: 1>, scalar_prefetch = 0 : i64, scratch_operands = 0 : i64, tpu.core_type = #tpu.core_type<tc>, window_params = [{transform_indices = @transform_0, window_bounds = array<i64: 8, 16>}, {pipeline_mode = #tpu.pipeline_mode<synchronous>, transform_indices = @transform_1, window_bounds = array<i64: 16, 128>}, {transform_indices = @transform_2, window_bounds = array<i64: 8, 128>}]} {
    %c0 = arith.constant 0 : index
    %c0_0 = arith.constant 0 : index
    %0 = vector.load %arg1[%c0, %c0_0] : memref<8x16xf32, #tpu.memory_space<vmem>>, vector<8x16xf32>
    %c0_1 = arith.constant 0 : index
    %c0_2 = arith.constant 0 : index
    %1 = vector.load %arg2[%c0_1, %c0_2] : memref<16x128xf32, #tpu.memory_space<vmem>>, vector<16x128xf32>
    %cst = arith.constant dense<0.000000e+00> : vector<8x128xf32>
    %2 = tpu.matmul %0, %1, %cst {dimension_numbers = #tpu.dot_dimension_numbers<[1], [0], [0], [1], [0, 0, 1, 1], [], []>} : vector<8x16xf32>, vector<16x128xf32>, vector<8x128xf32> -> vector<8x128xf32>
    %c0_3 = arith.constant 0 : index
    %c0_4 = arith.constant 0 : index
    %3 = vector.load %arg3[%c0_3, %c0_4] : memref<8x128xf32, #tpu.memory_space<vmem>>, vector<8x128xf32>
    tpu.vector_store %arg3[%c0_3, %c0_4], %2 {strides = array<i32>} : memref<8x128xf32, #tpu.memory_space<vmem>>, vector<8x128xf32>,
    return
  }
  func.func @transform_0(%arg0: i32) -> (i32, i32) {
    %c0_i32 = arith.constant 0 : i32
    %c0_i32_0 = arith.constant 0 : i32
    return %arg0, %c0_i32 : i32, i32
  }
  func.func @transform_1(%arg0: i32) -> (i32, i32) {
    %c0_i32 = arith.constant 0 : i32
    %c0_i32_0 = arith.constant 0 : i32
    %c0_i32_1 = arith.constant 0 : i32
    return %c0_i32, %c0_i32_0 : i32, i32
  }
  func.func @transform_2(%arg0: i32) -> (i32, i32) {
    %c0_i32 = arith.constant 0 : i32
    %c0_i32_0 = arith.constant 0 : i32
    return %arg0, %c0_i32 : i32, i32
  }
}

</mosaic_0001>

<llo_original>
// kernel: tpu_custom_call.1
$region0: #{tpu_custom_call.1}
  #allocation0 [shape = 'u32[]', space=smem, size = 0x4, offset = 0x4, fixed_abs, tag = 'smem constant byte address 0x4 - core index']
  #allocation1 [shape = 'u32[144,128]{1,0:T(1,128)}', space=vmem, size = 0x12000, scoped, tag = 'internal scratch']
  %s0 = inlined_call_operand.hbm [shape: f32[8,16], index: 0, kind: input, shape index: {}]
  %s1 = inlined_call_operand.hbm [shape: f32[16,128], index: 1, kind: input, shape index: {}]
  %s2 = inlined_call_operand.hbm [shape: f32[8,128], index: 2, kind: output, shape index: {}]
  %s3 = sld [smem:[#allocation0]]
  $region26: #{tpu_custom_call.1} parent=0
    _
  %s5 = ssub.s32 1, %s3
  %s6 = scalar_select 0, %s5, %s3
  $region1: #{tpu_custom_call.1} parent=0
    #allocation2 [shape = 'u8[4096]{0}', space=vmem, size = 0x1000, scoped, tag = 'input window, operand 0, single buffered']
    #allocation3 [shape = 's32[1]{0}', space=sflag, size = 0x4, scoped, tag = 'scoped memory for tpu_custom_call.1']
    #allocation4 [shape = 's32[1]{0}', space=sflag, size = 0x4, scoped, tag = 'scoped memory for tpu_custom_call.1']
    #allocation5 [shape = 'u8[8192]{0}', space=vmem, size = 0x2000, scoped, tag = 'input window, operand 1, single buffered']
    #allocation6 [shape = 's32[1]{0}', space=sflag, size = 0x4, scoped, tag = 'scoped memory for tpu_custom_call.1']
    #allocation7 [shape = 'u8[4096]{0}', space=vmem, size = 0x1000, scoped, tag = 'output window, operand 0, single buffered']
    %7 = vsyncpa [#allocation3], 0
    %8 = vsyncpa [#allocation6], 0
    %9 = vsyncpa [#allocation4], 0
    // Predicated region
    $region2: #{tpu_custom_call.1} parent=1 // pred_check
      _
    $region3: #{tpu_custom_call.1} parent=1 // pred_check_branch
      %11 = sbr.rel (0) target = $region5
    $region4: #{tpu_custom_call.1} parent=1 // pred_region
      %s13 = ssub.s32 128, 128
      %14 = vsyncadd [#allocation3], %s13
      %s16 = sshll.u32 [#allocation2], 4
      %s17 = int_to_ptr.vmem [resolvable:$true] %s16
      %19 = dma.hbm_to_vmem [thread:$0]  %s0, 128, %s17, [#allocation3]
    $region5: #{tpu_custom_call.1} parent=1 // pred_fallthru
      _
    // Predicated region
    $region6: #{tpu_custom_call.1} parent=1 // pred_check
      _
    $region7: #{tpu_custom_call.1} parent=1 // pred_check_branch
      %21 = sbr.rel (0) target = $region9
    $region8: #{tpu_custom_call.1} parent=1 // pred_region
      %s23 = ssub.s32 256, 256
      %24 = vsyncadd [#allocation6], %s23
      %s25 = sshll.u32 [#allocation5], 4
      %s26 = int_to_ptr.vmem [resolvable:$true] %s25
      %31 = dma.hbm_to_vmem [thread:$0]  %s1, 256, %s26, [#allocation6], 128, 128, 8
    $region9: #{tpu_custom_call.1} parent=1 // pred_fallthru
      _
    // Predicated region
    $region10: #{tpu_custom_call.1} parent=1 // pred_check
      _
    $region11: #{tpu_custom_call.1} parent=1 // pred_check_branch
      %33 = sbr.rel (0) target = $region13
    $region12: #{tpu_custom_call.1} parent=1 // pred_region
      %34 = dma.done [#allocation3], 128
    $region13: #{tpu_custom_call.1} parent=1 // pred_fallthru
      _
    // Predicated region
    $region14: #{tpu_custom_call.1} parent=1 // pred_check
      _
    $region15: #{tpu_custom_call.1} parent=1 // pred_check_branch
      %36 = sbr.rel (0) target = $region17
    $region16: #{tpu_custom_call.1} parent=1 // pred_region
      %37 = dma.done [#allocation6], 256
    $region17: #{tpu_custom_call.1} parent=1 // pred_fallthru
      _
    %v38 = vld [vmem:[#allocation2] sm:$0xff]
    %v39 = vld [vmem:[#allocation5] sm:$0xff]
    %v40 = vld [vmem:[#allocation5 + $0x8] sm:$0xff]
    %vm41 = vcmask 130048
    %v43 = vsel %vm41, %v38, 0
    %45 = vmatprep.subr.mxu0 0.0
    %46 = vmatpush1.msra.mxu0 %v39
    %47 = vmatprep.subr.mxu0 0.0
    %48 = vmatpush1.msra.mxu0 %v40
    %49 = vmatprep.subr.mxu0 0.0
    %50 = vmatpush1.msra.mxu0 0.0
    %51 = vmatprep.subr.mxu0 0.0
    %52 = vmatpush1.msra.mxu0 0.0
    %53 = vmatprep.subr.mxu0 0.0
    %54 = vmatpush1.msra.mxu0 0.0
    %55 = vmatprep.subr.mxu0 0.0
    %56 = vmatpush1.msra.mxu0 0.0
    %57 = vmatprep.subr.mxu0 0.0
    %58 = vmatpush1.msra.mxu0 0.0
    %59 = vmatprep.subr.mxu0 0.0
    %60 = vmatpush1.msra.mxu0 0.0
    %61 = vmatprep.subr.mxu0 0.0
    %62 = vmatpush1.msra.mxu0 0.0
    %63 = vmatprep.subr.mxu0 0.0
    %64 = vmatpush1.msra.mxu0 0.0
    %65 = vmatprep.subr.mxu0 0.0
    %66 = vmatpush1.msra.mxu0 0.0
    %67 = vmatprep.subr.mxu0 0.0
    %68 = vmatpush1.msra.mxu0 0.0
    %69 = vmatprep.subr.mxu0 0.0
    %70 = vmatpush1.msra.mxu0 0.0
    %71 = vmatprep.subr.mxu0 0.0
    %72 = vmatpush1.msra.mxu0 0.0
    %73 = vmatprep.subr.mxu0 0.0
    %74 = vmatpush1.msra.mxu0 0.0
    %75 = vmatprep.subr.mxu0 0.0
    %76 = vmatpush1.msra.mxu0 0.0
    %77 = vmatprep.subr.mxu0 0.0
    %78 = vmatpush1.msra.mxu0 0.0
    %79 = vmatprep.subr.mxu0 0.0
    %80 = vmatpush1.msra.mxu0 0.0
    %81 = vmatprep.subr.mxu0 0.0
    %82 = vmatpush1.msra.mxu0 0.0
    %83 = vmatprep.subr.mxu0 0.0
    %84 = vmatpush1.msra.mxu0 0.0
    %85 = vmatprep.subr.mxu0 0.0
    %86 = vmatpush1.msra.mxu0 0.0
    %87 = vmatprep.subr.mxu0 0.0
    %88 = vmatpush1.msra.mxu0 0.0
    %89 = vmatprep.subr.mxu0 0.0
    %90 = vmatpush1.msra.mxu0 0.0
    %91 = vmatprep.subr.mxu0 0.0
    %92 = vmatpush1.msra.mxu0 0.0
    %93 = vmatprep.subr.mxu0 0.0
    %94 = vmatpush1.msra.mxu0 0.0
    %95 = vmatprep.subr.mxu0 0.0
    %96 = vmatpush1.msra.mxu0 0.0
    %97 = vmatprep.subr.mxu0 0.0
    %98 = vmatpush1.msra.mxu0 0.0
    %99 = vmatprep.subr.mxu0 0.0
    %100 = vmatpush1.msra.mxu0 0.0
    %101 = vmatprep.subr.mxu0 0.0
    %102 = vmatpush1.msra.mxu0 0.0
    %103 = vmatprep.subr.mxu0 0.0
    %104 = vmatpush1.msra.mxu0 0.0
    %105 = vmatprep.subr.mxu0 0.0
    %106 = vmatpush1.msra.mxu0 0.0
    %107 = vmatprep.subr.mxu0 0.0
    %108 = vmatpush1.msra.mxu0 0.0
    %109 = vmatprep.mubr.f32.mxu0 0.0
    %110 = vmatmul.mubr.f32.gmra.mrb[0].mxu0 %v43
    %v111 = vpop.f32.mrb[0].mxu0
    %v112 = vadd.f32 0.0, %v111
    %v113 = vpop.f32.mrb[0].mxu0
    %114 = vdwg.mxu0
    %115 = vst [vmem:[#allocation7] sm:$0xff] %v112
    // Predicated region
    $region18: #{tpu_custom_call.1} parent=1 // pred_check
      _
    $region19: #{tpu_custom_call.1} parent=1 // pred_check_branch
      %117 = sbr.rel (0) target = $region21
    $region20: #{tpu_custom_call.1} parent=1 // pred_region
      %s119 = ssub.s32 128, 128
      %120 = vsyncadd [#allocation4], %s119
      %s122 = sshll.u32 [#allocation7], 4
      %s123 = int_to_ptr.vmem [resolvable:$true] %s122
      %125 = dma.vmem_to_hbm [thread:$0]  %s123, 128, %s2, [#allocation4]
    $region21: #{tpu_custom_call.1} parent=1 // pred_fallthru
      _
    // Predicated region
    $region22: #{tpu_custom_call.1} parent=1 // pred_check
      _
    $region23: #{tpu_custom_call.1} parent=1 // pred_check_branch
      %127 = sbr.rel (0) target = $region25
    $region24: #{tpu_custom_call.1} parent=1 // pred_region
      %128 = dma.done [#allocation4], 128
    $region25: #{tpu_custom_call.1} parent=1 // pred_fallthru
      _
    %129 = vsyncpa [#allocation3], 1
    %130 = vsyncpa [#allocation6], 1
    %131 = vsyncpa [#allocation4], 1

</llo_original>
